<compile_context>
chip_gen: v5e
topology: v5e:2x2
jax: 0.10.0
libtpu: 0.0.40
codegen_flags: <defaults>
</compile_context>

<pallas_src>
import jax
import jax.numpy as jnp
from jax.experimental import pallas as pl
from jax.experimental.pallas import tpu as pltpu


def mlp_kernel(x_ref, w1_ref, b1_ref, w2_ref, b2_ref, o_ref):
    # In-kernel cast to bf16 (VPU, hidden under MXU) — x arrives as f32 from HBM.
    x = x_ref[...].astype(jnp.bfloat16)

    # Layer 1: Linear(256 -> 512) + ReLU. bf16 x bf16 on the MXU, f32 accumulate.
    h = jnp.dot(x, w1_ref[...], preferred_element_type=jnp.float32)
    h = jnp.maximum(h + b1_ref[...], 0.0)            # f32 epilogue (VALU has slack)

    # Layer 2: Linear(512 -> 256) + ReLU. Cast hidden to bf16 for the native MXU path.
    y = jnp.dot(h.astype(jnp.bfloat16), w2_ref[...],
                preferred_element_type=jnp.float32)
    y = jnp.maximum(y + b2_ref[...], 0.0)            # f32 epilogue
    o_ref[...] = y.astype(o_ref.dtype)


def _round_up(a, m):
    return ((a + m - 1) // m) * m


def prepare_params(w1, b1, w2, b2):
    """One-time parameter prep: bf16 weights for the MXU, f32 row-vector biases."""
    return (w1.astype(jnp.bfloat16),
            b1.reshape(1, -1).astype(jnp.float32),
            w2.astype(jnp.bfloat16),
            b2.reshape(1, -1).astype(jnp.float32))


def neural_net_forward(x, w1b, b1f, w2b, b2f, *, block_m=2048, out_dtype=jnp.float32):
    """x: (B, 256) f32; w1b: (256, 512) bf16; b1f: (1, 512) f32;
       w2b: (512, 256) bf16; b2f: (1, 256) f32 (see prepare_params)."""
    B, D_in = x.shape
    D_hid = w1b.shape[1]
    D_out = w2b.shape[1]
    assert w1b.shape == (D_in, D_hid)
    assert w2b.shape == (D_hid, D_out)

    # Batch tile: multiple of 8 (f32 packs 8 sublanes/vreg), capped at 2048 so the
    # ~16 MiB VMEM footprint fits the default 32 MiB scoped limit on all generations
    # (v7x has only 64 MiB physical VMEM). Guarantee >=2 grid steps when B >= 16 so
    # the "parallel" batch axis actually spans both v7x TensorCores.
    block_m = min(max(_round_up(block_m, 8), 8), 2048)
    tm = min(block_m, max(8, _round_up(pl.cdiv(B, 2), 8)))
    grid_m = pl.cdiv(B, tm)   # ragged last tile handled by Pallas boundary masking

    out = pl.pallas_call(
        mlp_kernel,
        out_shape=jax.ShapeDtypeStruct((B, D_out), out_dtype),
        grid_spec=pltpu.PrefetchScalarGridSpec(
            num_scalar_prefetch=0,
            grid=(grid_m,),
            in_specs=[
                pl.BlockSpec((tm, D_in), lambda i: (i, 0)),       # x tile per grid step
                pl.BlockSpec((D_in, D_hid), lambda i: (0, 0)),    # weights: VMEM-resident
                pl.BlockSpec((1, D_hid), lambda i: (0, 0)),
                pl.BlockSpec((D_hid, D_out), lambda i: (0, 0)),
                pl.BlockSpec((1, D_out), lambda i: (0, 0)),
            ],
            out_specs=pl.BlockSpec((tm, D_out), lambda i: (i, 0)),
        ),
        compiler_params=pltpu.CompilerParams(
            dimension_semantics=("parallel",)),       # megacore sharding on v7x
    )(x, w1b, b1f, w2b, b2f)

    return out


def init_params(key):
    # Deterministic init mimicking PyTorch nn.Linear default: U(-1/sqrt(fan_in), +1/sqrt(fan_in)).
    k1, k2, k3, k4 = jax.random.split(key, 4)
    bound1 = 1.0 / jnp.sqrt(256.0)
    bound2 = 1.0 / jnp.sqrt(512.0)
    # Stored as (in, out) — i.e. PyTorch weight transposed.
    w1 = jax.random.uniform(k1, (256, 512), jnp.float32, -bound1, bound1)
    b1 = jax.random.uniform(k2, (512,), jnp.float32, -bound1, bound1)
    w2 = jax.random.uniform(k3, (512, 256), jnp.float32, -bound2, bound2)
    b2 = jax.random.uniform(k4, (256,), jnp.float32, -bound2, bound2)
    return w1, b1, w2, b2


if __name__ == "__main__":
    key = jax.random.PRNGKey(0)
    kx, kp = jax.random.split(key)

    # Small, deliberately non-multiple-of-tile batch: exercises the 2-step grid
    # (tm = round_up(cdiv(50,2), 8) = 32) and the masked ragged last tile (18 rows).
    B = 50
    x = jax.random.normal(kx, (B, 256), jnp.float32)
    w1, b1, w2, b2 = init_params(kp)
    w1b, b1f, w2b, b2f = prepare_params(w1, b1, w2, b2)   # one-time bf16 prep

    out = neural_net_forward(x, w1b, b1f, w2b, b2f)
    out = jax.block_until_ready(out)
    assert out.shape == (B, 256)
    assert out.dtype == jnp.float32

    # Reference 1: same bf16-quantized math, f32 accumulate (tight check).
    h_ref = jnp.maximum(
        jnp.dot(x.astype(jnp.bfloat16), w1.astype(jnp.bfloat16),
                preferred_element_type=jnp.float32) + b1, 0.0)
    ref_bf16 = jnp.maximum(
        jnp.dot(h_ref.astype(jnp.bfloat16), w2.astype(jnp.bfloat16),
                preferred_element_type=jnp.float32) + b2, 0.0)
    assert jnp.allclose(out, ref_bf16, atol=2e-2, rtol=2e-2)

    # Reference 2: full-f32 PyTorch-equivalent math (loose semantic check for bf16 weights).
    ref_f32 = jnp.maximum(x @ w1 + b1, 0.0)
    ref_f32 = jnp.maximum(ref_f32 @ w2 + b2, 0.0)
    assert jnp.allclose(out, ref_f32, atol=5e-2, rtol=5e-2)

    print("KERNEL_OK")
</pallas_src>

<mosaic_0001>
module attributes {stable_mosaic.version = 11 : i64} {
  func.func @mlp_kernel(%arg0: i32, %arg1: memref<32x256xf32, #tpu.memory_space<vmem>>, %arg2: memref<256x512xbf16, #tpu.memory_space<vmem>>, %arg3: memref<1x512xf32, #tpu.memory_space<vmem>>, %arg4: memref<512x256xbf16, #tpu.memory_space<vmem>>, %arg5: memref<1x256xf32, #tpu.memory_space<vmem>>, %arg6: memref<32x256xf32, #tpu.memory_space<vmem>>) attributes {dimension_semantics = [#tpu.dimension_semantics<parallel>], iteration_bounds = array<i64: 2>, scalar_prefetch = 0 : i64, scratch_operands = 0 : i64, tpu.core_type = #tpu.core_type<tc>, window_params = [{transform_indices = @transform_0, window_bounds = array<i64: 32, 256>}, {pipeline_mode = #tpu.pipeline_mode<synchronous>, transform_indices = @transform_1, window_bounds = array<i64: 256, 512>}, {pipeline_mode = #tpu.pipeline_mode<synchronous>, transform_indices = @transform_2, window_bounds = array<i64: 1, 512>}, {pipeline_mode = #tpu.pipeline_mode<synchronous>, transform_indices = @transform_3, window_bounds = array<i64: 512, 256>}, {pipeline_mode = #tpu.pipeline_mode<synchronous>, transform_indices = @transform_4, window_bounds = array<i64: 1, 256>}, {transform_indices = @transform_5, window_bounds = array<i64: 32, 256>}]} {
    %c0 = arith.constant 0 : index
    %c0_0 = arith.constant 0 : index
    %0 = vector.load %arg1[%c0, %c0_0] : memref<32x256xf32, #tpu.memory_space<vmem>>, vector<32x256xf32>
    %1 = arith.truncf %0 : vector<32x256xf32> to vector<32x256xbf16>
    %c0_1 = arith.constant 0 : index
    %c0_2 = arith.constant 0 : index
    %2 = vector.load %arg2[%c0_1, %c0_2] : memref<256x512xbf16, #tpu.memory_space<vmem>>, vector<256x512xbf16>
    %cst = arith.constant dense<0.000000e+00> : vector<32x512xf32>
    %3 = tpu.matmul %1, %2, %cst {dimension_numbers = #tpu.dot_dimension_numbers<[1], [0], [0], [1], [0, 0, 1, 1], [], []>} : vector<32x256xbf16>, vector<256x512xbf16>, vector<32x512xf32> -> vector<32x512xf32>
    %c0_3 = arith.constant 0 : index
    %c0_4 = arith.constant 0 : index
    %4 = vector.load %arg3[%c0_3, %c0_4] : memref<1x512xf32, #tpu.memory_space<vmem>>, vector<1x512xf32>
    %5 = vector.broadcast %4 : vector<1x512xf32> to vector<32x512xf32>
    %6 = arith.addf %3, %5 : vector<32x512xf32>
    %cst_5 = arith.constant 0.000000e+00 : f32
    %7 = vector.broadcast %cst_5 : f32 to vector<32x512xf32>
    %8 = arith.maximumf %6, %7 : vector<32x512xf32>
    %9 = arith.truncf %8 : vector<32x512xf32> to vector<32x512xbf16>
    %c0_6 = arith.constant 0 : index
    %c0_7 = arith.constant 0 : index
    %10 = vector.load %arg4[%c0_6, %c0_7] : memref<512x256xbf16, #tpu.memory_space<vmem>>, vector<512x256xbf16>
    %cst_8 = arith.constant dense<0.000000e+00> : vector<32x256xf32>
    %11 = tpu.matmul %9, %10, %cst_8 {dimension_numbers = #tpu.dot_dimension_numbers<[1], [0], [0], [1], [0, 0, 1, 1], [], []>} : vector<32x512xbf16>, vector<512x256xbf16>, vector<32x256xf32> -> vector<32x256xf32>
    %c0_9 = arith.constant 0 : index
    %c0_10 = arith.constant 0 : index
    %12 = vector.load %arg5[%c0_9, %c0_10] : memref<1x256xf32, #tpu.memory_space<vmem>>, vector<1x256xf32>
    %13 = vector.broadcast %12 : vector<1x256xf32> to vector<32x256xf32>
    %14 = arith.addf %11, %13 : vector<32x256xf32>
    %cst_11 = arith.constant 0.000000e+00 : f32
    %15 = vector.broadcast %cst_11 : f32 to vector<32x256xf32>
    %16 = arith.maximumf %14, %15 : vector<32x256xf32>
    %c0_12 = arith.constant 0 : index
    %c0_13 = arith.constant 0 : index
    %17 = vector.load %arg6[%c0_12, %c0_13] : memref<32x256xf32, #tpu.memory_space<vmem>>, vector<32x256xf32>
    tpu.vector_store %arg6[%c0_12, %c0_13], %16 {strides = array<i32>} : memref<32x256xf32, #tpu.memory_space<vmem>>, vector<32x256xf32>,
    return
  }
  func.func @transform_0(%arg0: i32) -> (i32, i32) {
    %c0_i32 = arith.constant 0 : i32
    %c0_i32_0 = arith.constant 0 : i32
    return %arg0, %c0_i32 : i32, i32
  }
  func.func @transform_1(%arg0: i32) -> (i32, i32) {
    %c0_i32 = arith.constant 0 : i32
    %c0_i32_0 = arith.constant 0 : i32
    %c0_i32_1 = arith.constant 0 : i32
    return %c0_i32, %c0_i32_0 : i32, i32
  }
  func.func @transform_2(%arg0: i32) -> (i32, i32) {
    %c0_i32 = arith.constant 0 : i32
    %c0_i32_0 = arith.constant 0 : i32
    %c0_i32_1 = arith.constant 0 : i32
    return %c0_i32, %c0_i32_0 : i32, i32
  }
  func.func @transform_3(%arg0: i32) -> (i32, i32) {
    %c0_i32 = arith.constant 0 : i32
    %c0_i32_0 = arith.constant 0 : i32
    %c0_i32_1 = arith.constant 0 : i32
    return %c0_i32, %c0_i32_0 : i32, i32
  }
  func.func @transform_4(%arg0: i32) -> (i32, i32) {
    %c0_i32 = arith.constant 0 : i32
    %c0_i32_0 = arith.constant 0 : i32
    %c0_i32_1 = arith.constant 0 : i32
    return %c0_i32, %c0_i32_0 : i32, i32
  }
  func.func @transform_5(%arg0: i32) -> (i32, i32) {
    %c0_i32 = arith.constant 0 : i32
    %c0_i32_0 = arith.constant 0 : i32
    return %arg0, %c0_i32 : i32, i32
  }
}

</mosaic_0001>

<llo_original>
// kernel: tpu_custom_call.1
$region0: #{tpu_custom_call.1}
  #allocation0 [shape = 'u32[]', space=smem, size = 0x4, offset = 0x4, fixed_abs, tag = 'smem constant byte address 0x4 - core index']
  #allocation1 [shape = 'u32[72,128]{1,0:T(1,128)}', space=vmem, size = 0x9000, scoped, tag = 'internal scratch']
  %s0 = inlined_call_operand.hbm [shape: f32[50,256], index: 0, kind: input, shape index: {}]
  %s1 = inlined_call_operand.hbm [shape: bf16[256,512], index: 1, kind: input, shape index: {}]
  %s2 = inlined_call_operand.hbm [shape: f32[1,512], index: 2, kind: input, shape index: {}]
  %s3 = inlined_call_operand.hbm [shape: bf16[512,256], index: 3, kind: input, shape index: {}]
  %s4 = inlined_call_operand.vmem [shape: f32[1,256], index: 4, kind: input, shape index: {}]
  %s5 = inlined_call_operand.hbm [shape: f32[50,256], index: 5, kind: output, shape index: {}]
  %s6 = sld [smem:[#allocation0]]
  $region69: #{tpu_custom_call.1} parent=0
    _
  %s8 = ssub.s32 1, %s6
  %s9 = scalar_select 0, %s8, %s6
  $region1: #{tpu_custom_call.1} parent=0
    #allocation2 [shape = 'u8[65536]{0}', space=vmem, size = 0x10000, scoped, tag = 'input window, operand 0']
    #allocation3 [shape = 's32[2]{0}', space=sflag, size = 0x8, scoped, tag = 'scoped memory for tpu_custom_call.1']
    #allocation4 [shape = 's32[2]{0}', space=sflag, size = 0x8, scoped, tag = 'scoped memory for tpu_custom_call.1']
    #allocation5 [shape = 'u8[262144]{0}', space=vmem, size = 0x40000, scoped, tag = 'input window, operand 1, single buffered']
    #allocation6 [shape = 's32[1]{0}', space=sflag, size = 0x4, scoped, tag = 'scoped memory for tpu_custom_call.1']
    #allocation7 [shape = 'u8[2048]{0}', space=vmem, size = 0x800, scoped, tag = 'input window, operand 2, single buffered']
    #allocation8 [shape = 'u8[262144]{0}', space=vmem, size = 0x40000, scoped, tag = 'input window, operand 3, single buffered']
    #allocation9 [shape = 's32[1]{0}', space=sflag, size = 0x4, scoped, tag = 'scoped memory for tpu_custom_call.1']
    #allocation10 [shape = 'u8[65536]{0}', space=vmem, size = 0x10000, scoped, tag = 'output window, operand 0']
    %10 = vsyncpa [#allocation3], 0
    %s11 = scalar_lea.sflag [#allocation3], 1
    %12 = vsyncpa %s11, 0
    %13 = vsyncpa [#allocation6], 0
    %14 = vsyncpa [#allocation9], 0
    %15 = vsyncpa [#allocation4], 0
    %s16 = scalar_lea.sflag [#allocation4], 1
    %17 = vsyncpa %s16, 0
    loop: start=0, step=1, limit=4
    $region2: #{tpu_custom_call.1} parent=1 // loop_pre_header
      _
    $region3: #{tpu_custom_call.1} parent=1 // loop_header
      %s19 = sphi 0, %s23
      %p20 = scmp.ge.s32.totalorder %s19, 4
      %s29 = sphi 0, %s31
      %s32 = sphi 0, %s29
      %s33 = sphi 0, %s32
      %s49 = sphi 0, %s33
      %s53 = sphi 0, %s53
      %s55 = sphi 0, %s53
      %s56 = sphi 0, %s55
      %s70 = sphi 0, %s56
      %s74 = sphi 0, %s74
      %s76 = sphi 0, %s74
      %s77 = sphi 0, %s76
      %s91 = sphi 0, %s77
      %s95 = sphi 0, %s95
      %s97 = sphi 0, %s95
      %s98 = sphi 0, %s97
      %s112 = sphi 0, %s98
      %s116 = sphi 0, %s116
      %s118 = sphi 0, %s116
      %s119 = sphi 0, %s118
      %s133 = sphi 0, %s119
      %s139 = sphi 0, %s141
      %s142 = sphi 0, %s139
      %s143 = sphi 0, %s142
      %s159 = sphi 0, %s143
    $region4: #{tpu_custom_call.1} parent=1 // loop_header_branch
      %22 = sbr.rel (%p20) target = $region8
    $region5: #{tpu_custom_call.1} parent=1 // loop_body
      %s24 = ssub.s32 %s19, 1
      %s25 = ssub.s32 %s19, 2
      %s26 = sadd.s32 %s19, 1
      %s27 = ssub.s32 %s19, %s26
      %p28 = scmp.eq.s32.totalorder %s27, 0
      %s30 = sadd.s32 %s29, 1
      %s31 = scalar_select %p28, %s29, %s30
      %p34 = pneg %p28
      %p35 = scmp.eq.s32.totalorder %s19, 1
      %p36 = por %p34, %p35
      %p37 = scmp.ne.s32.totalorder %s29, %s32
      %p38 = scmp.eq.s32.totalorder %s19, 0
      %p39 = por %p37, %p38
      %p40 = scmp.ne.s32.totalorder %s29, %s32
      %p41 = scmp.eq.s32.totalorder %s24, 1
      %p42 = por %p40, %p41
      %p43 = scmp.ne.s32.totalorder %s32, %s33
      %p44 = scmp.eq.s32.totalorder %s24, 0
      %p45 = por %p43, %p44
      %p46 = scmp.ne.s32.totalorder %s32, %s33
      %p47 = scmp.eq.s32.totalorder %s25, 1
      %p48 = por %p46, %p47
      %p50 = scmp.ne.s32.totalorder %s33, %s49
      %p51 = scmp.eq.s32.totalorder %s25, 0
      %p52 = por %p50, %p51
      %s54 = sadd.s32 %s53, 1
      %p57 = scmp.eq.s32.totalorder %s19, 1
      %p58 = scmp.ne.s32.totalorder %s53, %s55
      %p59 = scmp.eq.s32.totalorder %s19, 0
      %p60 = por %p58, %p59
      %p61 = scmp.ne.s32.totalorder %s53, %s55
      %p62 = scmp.eq.s32.totalorder %s24, 1
      %p63 = por %p61, %p62
      %p64 = scmp.ne.s32.totalorder %s55, %s56
      %p65 = scmp.eq.s32.totalorder %s24, 0
      %p66 = por %p64, %p65
      %p67 = scmp.ne.s32.totalorder %s55, %s56
      %p68 = scmp.eq.s32.totalorder %s25, 1
      %p69 = por %p67, %p68
      %p71 = scmp.ne.s32.totalorder %s56, %s70
      %p72 = scmp.eq.s32.totalorder %s25, 0
      %p73 = por %p71, %p72
      %s75 = sadd.s32 %s74, 1
      %p78 = scmp.eq.s32.totalorder %s19, 1
      %p79 = scmp.ne.s32.totalorder %s74, %s76
      %p80 = scmp.eq.s32.totalorder %s19, 0
      %p81 = por %p79, %p80
      %p82 = scmp.ne.s32.totalorder %s74, %s76
      %p83 = scmp.eq.s32.totalorder %s24, 1
      %p84 = por %p82, %p83
      %p85 = scmp.ne.s32.totalorder %s76, %s77
      %p86 = scmp.eq.s32.totalorder %s24, 0
      %p87 = por %p85, %p86
      %p88 = scmp.ne.s32.totalorder %s76, %s77
      %p89 = scmp.eq.s32.totalorder %s25, 1
      %p90 = por %p88, %p89
      %p92 = scmp.ne.s32.totalorder %s77, %s91
      %p93 = scmp.eq.s32.totalorder %s25, 0
      %p94 = por %p92, %p93
      %s96 = sadd.s32 %s95, 1
      %p99 = scmp.eq.s32.totalorder %s19, 1
      %p100 = scmp.ne.s32.totalorder %s95, %s97
      %p101 = scmp.eq.s32.totalorder %s19, 0
      %p102 = por %p100, %p101
      %p103 = scmp.ne.s32.totalorder %s95, %s97
      %p104 = scmp.eq.s32.totalorder %s24, 1
      %p105 = por %p103, %p104
      %p106 = scmp.ne.s32.totalorder %s97, %s98
      %p107 = scmp.eq.s32.totalorder %s24, 0
      %p108 = por %p106, %p107
      %p109 = scmp.ne.s32.totalorder %s97, %s98
      %p110 = scmp.eq.s32.totalorder %s25, 1
      %p111 = por %p109, %p110
      %p113 = scmp.ne.s32.totalorder %s98, %s112
      %p114 = scmp.eq.s32.totalorder %s25, 0
      %p115 = por %p113, %p114
      %s117 = sadd.s32 %s116, 1
      %p120 = scmp.eq.s32.totalorder %s19, 1
      %p121 = scmp.ne.s32.totalorder %s116, %s118
      %p122 = scmp.eq.s32.totalorder %s19, 0
      %p123 = por %p121, %p122
      %p124 = scmp.ne.s32.totalorder %s116, %s118
      %p125 = scmp.eq.s32.totalorder %s24, 1
      %p126 = por %p124, %p125
      %p127 = scmp.ne.s32.totalorder %s118, %s119
      %p128 = scmp.eq.s32.totalorder %s24, 0
      %p129 = por %p127, %p128
      %p130 = scmp.ne.s32.totalorder %s118, %s119
      %p131 = scmp.eq.s32.totalorder %s25, 1
      %p132 = por %p130, %p131
      %p134 = scmp.ne.s32.totalorder %s119, %s133
      %p135 = scmp.eq.s32.totalorder %s25, 0
      %p136 = por %p134, %p135
      %s137 = ssub.s32 %s19, %s26
      %p138 = scmp.eq.s32.totalorder %s137, 0
      %s140 = sadd.s32 %s139, 1
      %s141 = scalar_select %p138, %s139, %s140
      %p144 = pneg %p138
      %p145 = scmp.eq.s32.totalorder %s19, 1
      %p146 = por %p144, %p145
      %p147 = scmp.ne.s32.totalorder %s139, %s142
      %p148 = scmp.eq.s32.totalorder %s19, 0
      %p149 = por %p147, %p148
      %p150 = scmp.ne.s32.totalorder %s139, %s142
      %p151 = scmp.eq.s32.totalorder %s24, 1
      %p152 = por %p150, %p151
      %p153 = scmp.ne.s32.totalorder %s142, %s143
      %p154 = scmp.eq.s32.totalorder %s24, 0
      %p155 = por %p153, %p154
      %p156 = scmp.ne.s32.totalorder %s142, %s143
      %p157 = scmp.eq.s32.totalorder %s25, 1
      %p158 = por %p156, %p157
      %p160 = scmp.ne.s32.totalorder %s143, %s159
      %p161 = scmp.eq.s32.totalorder %s25, 0
      %p162 = por %p160, %p161
      %p163 = scmp.le.s32.totalorder 1, %s19
      %p164 = scmp.lt.s32.totalorder %s19, 3
      %p165 = pnand %p163, %p164
      %p166 = pneg %p165
      // Predicated region
      $region9: #{tpu_custom_call.1} parent=5 // pred_check
        _
      $region10: #{tpu_custom_call.1} parent=5 // pred_check_branch
        %168 = sbr.rel (%p165) target = $region12
      $region11: #{tpu_custom_call.1} parent=5 // pred_region
        %s169 = ssub.s32 %s19, 1
        // Predicated region
        $region13: #{tpu_custom_call.1} parent=11 // pred_check
          %p170 = pneg %p66
        $region14: #{tpu_custom_call.1} parent=11 // pred_check_branch
          %172 = sbr.rel (%p170) target = $region16
        $region15: #{tpu_custom_call.1} parent=11 // pred_region
          %174 = vsyncadd [#allocation6], 0
          %s175 = sshll.u32 %s1, 4
          %s176 = int_to_ptr.hbm [resolvable:$true] %s175
          %s177 = sshll.u32 [#allocation5], 4
          %s178 = int_to_ptr.vmem [resolvable:$true] %s177
          %183 = dma.hbm_to_vmem [thread:$0]  %s176, 8192, %s178, [#allocation6], 256, 256, 16
        $region16: #{tpu_custom_call.1} parent=11 // pred_fallthru
          _
        // Predicated region
        $region17: #{tpu_custom_call.1} parent=11 // pred_check
          %p184 = pneg %p87
        $region18: #{tpu_custom_call.1} parent=11 // pred_check_branch
          %186 = sbr.rel (%p184) target = $region20
        $region19: #{tpu_custom_call.1} parent=11 // pred_region
          %188 = vsyncadd [#allocation6], 0
          %s190 = sshll.u32 %s2, 4
          %s191 = int_to_ptr.hbm [resolvable:$true] %s190
          %s192 = sshll.u32 [#allocation7], 4
          %s193 = int_to_ptr.vmem [resolvable:$true] %s192
          %195 = dma.hbm_to_vmem [thread:$0]  %s191, 64, %s193, [#allocation6]
        $region20: #{tpu_custom_call.1} parent=11 // pred_fallthru
          _
        // Predicated region
        $region21: #{tpu_custom_call.1} parent=11 // pred_check
          %p196 = pneg %p108
        $region22: #{tpu_custom_call.1} parent=11 // pred_check_branch
          %198 = sbr.rel (%p196) target = $region24
        $region23: #{tpu_custom_call.1} parent=11 // pred_region
          %200 = vsyncadd [#allocation9], 0
          %s201 = sshll.u32 %s3, 4
          %s202 = int_to_ptr.hbm [resolvable:$true] %s201
          %s203 = sshll.u32 [#allocation8], 4
          %s204 = int_to_ptr.vmem [resolvable:$true] %s203
          %209 = dma.hbm_to_vmem [thread:$0]  %s202, 8192, %s204, [#allocation9], 128, 128, 8
        $region24: #{tpu_custom_call.1} parent=11 // pred_fallthru
          _
        // Predicated region
        $region25: #{tpu_custom_call.1} parent=11 // pred_check
          %p210 = pneg %p129
        $region26: #{tpu_custom_call.1} parent=11 // pred_check_branch
          %212 = sbr.rel (%p210) target = $region28
        $region27: #{tpu_custom_call.1} parent=11 // pred_region
          _
        $region28: #{tpu_custom_call.1} parent=11 // pred_fallthru
          _
      $region12: #{tpu_custom_call.1} parent=5 // pred_fallthru
        _
      %p213 = scmp.lt.s32.totalorder %s19, 2
      // Predicated region
      $region29: #{tpu_custom_call.1} parent=5 // pred_check
        %p214 = pneg %p213
      $region30: #{tpu_custom_call.1} parent=5 // pred_check_branch
        %216 = sbr.rel (%p214) target = $region32
      $region31: #{tpu_custom_call.1} parent=5 // pred_region
        // Predicated region
        $region33: #{tpu_custom_call.1} parent=31 // pred_check
          %p217 = pneg %p39
        $region34: #{tpu_custom_call.1} parent=31 // pred_check_branch
          %219 = sbr.rel (%p217) target = $region36
        $region35: #{tpu_custom_call.1} parent=31 // pred_region
          %s220 = sand.u32 %s29, 1
          %s221 = scalar_lea.sflag [#allocation3], %s220
          %s222 = sand.u32 %s29, 1
          %s223 = smul.addr %s222, 64
          %s224 = scalar_lea.vmem [#allocation2], %s223
          %s225 = smul.u32 4, %s19
          %s226 = ssub.s32 7, %s225
          %p227 = scmp.lt.s32.totalorder %s226, 4
          %s228 = scalar_select %p227, %s226, 4
          %s229 = smul.u32 8, %s228
          %s230 = smul.u32 %s229, 2
          %s231 = ssub.s32 64, %s230
          %s232 = sshll.u32 %s231, 4
          %233 = vsyncadd %s221, %s232
          %p234 = scmp.ne.s32.totalorder 0, %s230
          %s235 = smul.addr %s225, 2
          %s236 = smul.addr %s235, 8
          %s237 = scalar_lea.hbm %s0, %s236
          %s238 = smul.u32 16, %s228
          %s239 = sshll.u32 %s237, 4
          %s240 = int_to_ptr.hbm [resolvable:$true] %s239
          %s241 = sshll.u32 %s224, 4
          %s242 = int_to_ptr.vmem [resolvable:$true] %s241
          %s243 = sshll.u32 %s238, 4
          %247 = dma.hbm_to_vmem [thread:$0]  (%p234), %s240, %s243, %s242, %s221, 256, 256, 16
        $region36: #{tpu_custom_call.1} parent=31 // pred_fallthru
          _
      $region32: #{tpu_custom_call.1} parent=5 // pred_fallthru
        _
      %p248 = scmp.le.s32.totalorder 1, %s19
      %p249 = scmp.lt.s32.totalorder %s19, 3
      %p250 = pnand %p248, %p249
      %p251 = pneg %p250
      // Predicated region
      $region37: #{tpu_custom_call.1} parent=5 // pred_check
        _
      $region38: #{tpu_custom_call.1} parent=5 // pred_check_branch
        %253 = sbr.rel (%p250) target = $region40
      $region39: #{tpu_custom_call.1} parent=5 // pred_region
        %s254 = ssub.s32 %s19, 1
        %s255 = sand.u32 %s32, 1
        %s256 = scalar_lea.sflag [#allocation3], %s255
        %s257 = sand.u32 %s32, 1
        %s258 = smul.addr %s257, 64
        %s259 = scalar_lea.vmem [#allocation2], %s258
        // Predicated region
        $region41: #{tpu_custom_call.1} parent=39 // pred_check
          %p260 = pneg %p45
        $region42: #{tpu_custom_call.1} parent=39 // pred_check_branch
          %262 = sbr.rel (%p260) target = $region44
        $region43: #{tpu_custom_call.1} parent=39 // pred_region
          %264 = dma.done %s256, 1024
        $region44: #{tpu_custom_call.1} parent=39 // pred_fallthru
          _
        // Predicated region
        $region45: #{tpu_custom_call.1} parent=39 // pred_check
          %p265 = pneg %p66
        $region46: #{tpu_custom_call.1} parent=39 // pred_check_branch
          %267 = sbr.rel (%p265) target = $region48
        $region47: #{tpu_custom_call.1} parent=39 // pred_region
          %269 = dma.done [#allocation6], 8192
        $region48: #{tpu_custom_call.1} parent=39 // pred_fallthru
          _
        // Predicated region
        $region49: #{tpu_custom_call.1} parent=39 // pred_check
          %p270 = pneg %p87
        $region50: #{tpu_custom_call.1} parent=39 // pred_check_branch
          %272 = sbr.rel (%p270) target = $region52
        $region51: #{tpu_custom_call.1} parent=39 // pred_region
          %274 = dma.done [#allocation6], 64
        $region52: #{tpu_custom_call.1} parent=39 // pred_fallthru
          _
        // Predicated region
        $region53: #{tpu_custom_call.1} parent=39 // pred_check
          %p275 = pneg %p108
        $region54: #{tpu_custom_call.1} parent=39 // pred_check_branch
          %277 = sbr.rel (%p275) target = $region56
        $region55: #{tpu_custom_call.1} parent=39 // pred_region
          %279 = dma.done [#allocation9], 8192
        $region56: #{tpu_custom_call.1} parent=39 // pred_fallthru
          _
        %s280 = sand.u32 %s32, 1
        %s281 = scalar_lea.sflag [#allocation3], %s280
        %s282 = sand.u32 %s32, 1
        %s283 = smul.addr %s282, 64
        %s284 = scalar_lea.vmem [#allocation2], %s283
        %p285 = pneg %p45
        %p286 = pneg %p42
        %p287 = pneg %p66
        %p288 = pneg %p63
        %p289 = pneg %p87
        %p290 = pneg %p84
        %p291 = pneg %p108
        %p292 = pneg %p105
        %p293 = pneg %p129
        %p294 = pneg %p126
        %p295 = pneg %p155
        %p296 = pneg %p152
        %s297 = sand.u32 %s142, 1
        %s298 = scalar_lea.sflag [#allocation4], %s297
        %s299 = sand.u32 %s142, 1
        %s300 = smul.addr %s299, 64
        %s301 = scalar_lea.vmem [#allocation10], %s300
        %s302 = smul.u32 4, %s24
        %s303 = ssub.s32 7, %s302
        %p304 = scmp.lt.s32.totalorder %s303, 4
        %s305 = scalar_select %p304, %s303, 4
        %s306 = smul.u32 8, %s305
        %s307 = smul.u32 %s306, 2
        %s308 = smul.u32 4, %s24
        %s309 = ssub.s32 7, %s308
        %p310 = scmp.lt.s32.totalorder %s309, 4
        %s311 = scalar_select %p310, %s309, 4
        %s312 = smul.u32 8, %s311
        %s313 = smul.u32 %s312, 2
        %v314 = vld [vmem:[%s259] sm:$0xff]
        %v315 = vld [vmem:[%s259 + $0x8] sm:$0xff]
        %v316 = vld [vmem:[%s259 + $0x10] sm:$0xff]
        %v317 = vld [vmem:[%s259 + $0x18] sm:$0xff]
        %v318 = vld [vmem:[%s259 + $0x20] sm:$0xff]
        %v319 = vld [vmem:[%s259 + $0x28] sm:$0xff]
        %v320 = vld [vmem:[%s259 + $0x30] sm:$0xff]
        %v321 = vld [vmem:[%s259 + $0x38] sm:$0xff]
        %v322 = vpack.c.bf16 %v316, %v314
        %v323 = vpack.c.bf16 %v317, %v315
        %v324 = vpack.c.bf16 %v320, %v318
        %v325 = vpack.c.bf16 %v321, %v319
        %v326 = vld [vmem:[#allocation5] sm:$0xff]
        %v327 = vld [vmem:[#allocation5 + $0x8] sm:$0xff]
        %v328 = vld [vmem:[#allocation5 + $0x10] sm:$0xff]
        %v329 = vld [vmem:[#allocation5 + $0x18] sm:$0xff]
        %v330 = vld [vmem:[#allocation5 + $0x20] sm:$0xff]
        %v331 = vld [vmem:[#allocation5 + $0x28] sm:$0xff]
        %v332 = vld [vmem:[#allocation5 + $0x30] sm:$0xff]
        %v333 = vld [vmem:[#allocation5 + $0x38] sm:$0xff]
        %v334 = vld [vmem:[#allocation5 + $0x40] sm:$0xff]
        %v335 = vld [vmem:[#allocation5 + $0x48] sm:$0xff]
        %v336 = vld [vmem:[#allocation5 + $0x50] sm:$0xff]
        %v337 = vld [vmem:[#allocation5 + $0x58] sm:$0xff]
        %v338 = vld [vmem:[#allocation5 + $0x60] sm:$0xff]
        %v339 = vld [vmem:[#allocation5 + $0x68] sm:$0xff]
        %v340 = vld [vmem:[#allocation5 + $0x70] sm:$0xff]
        %v341 = vld [vmem:[#allocation5 + $0x78] sm:$0xff]
        %v342 = vld [vmem:[#allocation5 + $0x80] sm:$0xff]
        %v343 = vld [vmem:[#allocation5 + $0x88] sm:$0xff]
        %v344 = vld [vmem:[#allocation5 + $0x90] sm:$0xff]
        %v345 = vld [vmem:[#allocation5 + $0x98] sm:$0xff]
        %v346 = vld [vmem:[#allocation5 + $0xa0] sm:$0xff]
        %v347 = vld [vmem:[#allocation5 + $0xa8] sm:$0xff]
        %v348 = vld [vmem:[#allocation5 + $0xb0] sm:$0xff]
        %v349 = vld [vmem:[#allocation5 + $0xb8] sm:$0xff]
        %v350 = vld [vmem:[#allocation5 + $0xc0] sm:$0xff]
        %v351 = vld [vmem:[#allocation5 + $0xc8] sm:$0xff]
        %v352 = vld [vmem:[#allocation5 + $0xd0] sm:$0xff]
        %v353 = vld [vmem:[#allocation5 + $0xd8] sm:$0xff]
        %v354 = vld [vmem:[#allocation5 + $0xe0] sm:$0xff]
        %v355 = vld [vmem:[#allocation5 + $0xe8] sm:$0xff]
        %v356 = vld [vmem:[#allocation5 + $0xf0] sm:$0xff]
        %v357 = vld [vmem:[#allocation5 + $0xf8] sm:$0xff]
        %v358 = vld [vmem:[#allocation5 + $0x100] sm:$0xff]
        %v359 = vld [vmem:[#allocation5 + $0x108] sm:$0xff]
        %v360 = vld [vmem:[#allocation5 + $0x110] sm:$0xff]
        %v361 = vld [vmem:[#allocation5 + $0x118] sm:$0xff]
        %v362 = vld [vmem:[#allocation5 + $0x120] sm:$0xff]
        %v363 = vld [vmem:[#allocation5 + $0x128] sm:$0xff]
        %v364 = vld [vmem:[#allocation5 + $0x130] sm:$0xff]
        %v365 = vld [vmem:[#allocation5 + $0x138] sm:$0xff]
        %v366 = vld [vmem:[#allocation5 + $0x140] sm:$0xff]
        %v367 = vld [vmem:[#allocation5 + $0x148] sm:$0xff]
        %v368 = vld [vmem:[#allocation5 + $0x150] sm:$0xff]
        %v369 = vld [vmem:[#allocation5 + $0x158] sm:$0xff]
        %v370 = vld [vmem:[#allocation5 + $0x160] sm:$0xff]
        %v371 = vld [vmem:[#allocation5 + $0x168] sm:$0xff]
        %v372 = vld [vmem:[#allocation5 + $0x170] sm:$0xff]
        %v373 = vld [vmem:[#allocation5 + $0x178] sm:$0xff]
        %v374 = vld [vmem:[#allocation5 + $0x180] sm:$0xff]
        %v375 = vld [vmem:[#allocation5 + $0x188] sm:$0xff]
        %v376 = vld [vmem:[#allocation5 + $0x190] sm:$0xff]
        %v377 = vld [vmem:[#allocation5 + $0x198] sm:$0xff]
        %v378 = vld [vmem:[#allocation5 + $0x1a0] sm:$0xff]
        %v379 = vld [vmem:[#allocation5 + $0x1a8] sm:$0xff]
        %v380 = vld [vmem:[#allocation5 + $0x1b0] sm:$0xff]
        %v381 = vld [vmem:[#allocation5 + $0x1b8] sm:$0xff]
        %v382 = vld [vmem:[#allocation5 + $0x1c0] sm:$0xff]
        %v383 = vld [vmem:[#allocation5 + $0x1c8] sm:$0xff]
        %v384 = vld [vmem:[#allocation5 + $0x1d0] sm:$0xff]
        %v385 = vld [vmem:[#allocation5 + $0x1d8] sm:$0xff]
        %v386 = vld [vmem:[#allocation5 + $0x1e0] sm:$0xff]
        %v387 = vld [vmem:[#allocation5 + $0x1e8] sm:$0xff]
        %v388 = vld [vmem:[#allocation5 + $0x1f0] sm:$0xff]
        %v389 = vld [vmem:[#allocation5 + $0x1f8] sm:$0xff]
        %v390 = vld [vmem:[#allocation7] sm:$0xf]
        %v392 = vperm.slane %v390, 0
        %v393 = vperm.slane %v390, 1
        %v394 = vperm.slane %v390, 2
        %v395 = vperm.slane %v390, 3
        %v464 = vunpack.c.l.b16 %v326
        %v465 = vunpack.c.h.b16 %v326
        %v466 = vunpack.c.l.b16 %v327
        %v467 = vunpack.c.h.b16 %v327
        %v468 = vunpack.c.l.b16 %v328
        %v469 = vunpack.c.h.b16 %v328
        %v470 = vunpack.c.l.b16 %v329
        %v471 = vunpack.c.h.b16 %v329
        %v472 = vunpack.c.l.b16 %v330
        %v473 = vunpack.c.h.b16 %v330
        %v474 = vunpack.c.l.b16 %v331
        %v475 = vunpack.c.h.b16 %v331
        %v476 = vunpack.c.l.b16 %v332
        %v477 = vunpack.c.h.b16 %v332
        %v478 = vunpack.c.l.b16 %v333
        %v479 = vunpack.c.h.b16 %v333
        %v480 = vunpack.c.l.b16 %v334
        %v481 = vunpack.c.h.b16 %v334
        %v482 = vunpack.c.l.b16 %v335
        %v483 = vunpack.c.h.b16 %v335
        %v484 = vunpack.c.l.b16 %v336
        %v485 = vunpack.c.h.b16 %v336
        %v486 = vunpack.c.l.b16 %v337
        %v487 = vunpack.c.h.b16 %v337
        %v488 = vunpack.c.l.b16 %v338
        %v489 = vunpack.c.h.b16 %v338
        %v490 = vunpack.c.l.b16 %v339
        %v491 = vunpack.c.h.b16 %v339
        %v492 = vunpack.c.l.b16 %v340
        %v493 = vunpack.c.h.b16 %v340
        %v494 = vunpack.c.l.b16 %v341
        %v495 = vunpack.c.h.b16 %v341
        %v496 = vunpack.c.l.b16 %v342
        %v497 = vunpack.c.h.b16 %v342
        %v498 = vunpack.c.l.b16 %v343
        %v499 = vunpack.c.h.b16 %v343
        %v500 = vunpack.c.l.b16 %v344
        %v501 = vunpack.c.h.b16 %v344
        %v502 = vunpack.c.l.b16 %v345
        %v503 = vunpack.c.h.b16 %v345
        %v504 = vunpack.c.l.b16 %v346
        %v505 = vunpack.c.h.b16 %v346
        %v506 = vunpack.c.l.b16 %v347
        %v507 = vunpack.c.h.b16 %v347
        %v508 = vunpack.c.l.b16 %v348
        %v509 = vunpack.c.h.b16 %v348
        %v510 = vunpack.c.l.b16 %v349
        %v511 = vunpack.c.h.b16 %v349
        %v512 = vunpack.c.l.b16 %v350
        %v513 = vunpack.c.h.b16 %v350
        %v514 = vunpack.c.l.b16 %v351
        %v515 = vunpack.c.h.b16 %v351
        %v516 = vunpack.c.l.b16 %v352
        %v517 = vunpack.c.h.b16 %v352
        %v518 = vunpack.c.l.b16 %v353
        %v519 = vunpack.c.h.b16 %v353
        %v520 = vunpack.c.l.b16 %v354
        %v521 = vunpack.c.h.b16 %v354
        %v522 = vunpack.c.l.b16 %v355
        %v523 = vunpack.c.h.b16 %v355
        %v524 = vunpack.c.l.b16 %v356
        %v525 = vunpack.c.h.b16 %v356
        %v526 = vunpack.c.l.b16 %v357
        %v527 = vunpack.c.h.b16 %v357
        %v528 = vunpack.c.l.b16 %v358
        %v529 = vunpack.c.h.b16 %v358
        %v530 = vunpack.c.l.b16 %v359
        %v531 = vunpack.c.h.b16 %v359
        %v532 = vunpack.c.l.b16 %v360
        %v533 = vunpack.c.h.b16 %v360
        %v534 = vunpack.c.l.b16 %v361
        %v535 = vunpack.c.h.b16 %v361
        %v536 = vunpack.c.l.b16 %v362
        %v537 = vunpack.c.h.b16 %v362
        %v538 = vunpack.c.l.b16 %v363
        %v539 = vunpack.c.h.b16 %v363
        %v540 = vunpack.c.l.b16 %v364
        %v541 = vunpack.c.h.b16 %v364
        %v542 = vunpack.c.l.b16 %v365
        %v543 = vunpack.c.h.b16 %v365
        %v544 = vunpack.c.l.b16 %v366
        %v545 = vunpack.c.h.b16 %v366
        %v546 = vunpack.c.l.b16 %v367
        %v547 = vunpack.c.h.b16 %v367
        %v548 = vunpack.c.l.b16 %v368
        %v549 = vunpack.c.h.b16 %v368
        %v550 = vunpack.c.l.b16 %v369
        %v551 = vunpack.c.h.b16 %v369
        %v552 = vunpack.c.l.b16 %v370
        %v553 = vunpack.c.h.b16 %v370
        %v554 = vunpack.c.l.b16 %v371
        %v555 = vunpack.c.h.b16 %v371
        %v556 = vunpack.c.l.b16 %v372
        %v557 = vunpack.c.h.b16 %v372
        %v558 = vunpack.c.l.b16 %v373
        %v559 = vunpack.c.h.b16 %v373
        %v560 = vunpack.c.l.b16 %v374
        %v561 = vunpack.c.h.b16 %v374
        %v562 = vunpack.c.l.b16 %v375
        %v563 = vunpack.c.h.b16 %v375
        %v564 = vunpack.c.l.b16 %v376
        %v565 = vunpack.c.h.b16 %v376
        %v566 = vunpack.c.l.b16 %v377
        %v567 = vunpack.c.h.b16 %v377
        %v568 = vunpack.c.l.b16 %v378
        %v569 = vunpack.c.h.b16 %v378
        %v570 = vunpack.c.l.b16 %v379
        %v571 = vunpack.c.h.b16 %v379
        %v572 = vunpack.c.l.b16 %v380
        %v573 = vunpack.c.h.b16 %v380
        %v574 = vunpack.c.l.b16 %v381
        %v575 = vunpack.c.h.b16 %v381
        %v576 = vunpack.c.l.b16 %v382
        %v577 = vunpack.c.h.b16 %v382
        %v578 = vunpack.c.l.b16 %v383
        %v579 = vunpack.c.h.b16 %v383
        %v580 = vunpack.c.l.b16 %v384
        %v581 = vunpack.c.h.b16 %v384
        %v582 = vunpack.c.l.b16 %v385
        %v583 = vunpack.c.h.b16 %v385
        %v584 = vunpack.c.l.b16 %v386
        %v585 = vunpack.c.h.b16 %v386
        %v586 = vunpack.c.l.b16 %v387
        %v587 = vunpack.c.h.b16 %v387
        %v588 = vunpack.c.l.b16 %v388
        %v589 = vunpack.c.h.b16 %v388
        %v590 = vunpack.c.l.b16 %v389
        %v591 = vunpack.c.h.b16 %v389
        %v592 = vpack.c.b16 %v468, %v464
        %v593 = vpack.c.b16 %v469, %v465
        %v594 = vpack.c.b16 %v470, %v466
        %v595 = vpack.c.b16 %v471, %v467
        %v596 = vpack.c.b16 %v476, %v472
        %v597 = vpack.c.b16 %v477, %v473
        %v598 = vpack.c.b16 %v478, %v474
        %v599 = vpack.c.b16 %v479, %v475
        %v600 = vpack.c.b16 %v484, %v480
        %v601 = vpack.c.b16 %v485, %v481
        %v602 = vpack.c.b16 %v486, %v482
        %v603 = vpack.c.b16 %v487, %v483
        %v604 = vpack.c.b16 %v492, %v488
        %v605 = vpack.c.b16 %v493, %v489
        %v606 = vpack.c.b16 %v494, %v490
        %v607 = vpack.c.b16 %v495, %v491
        %v608 = vpack.c.b16 %v500, %v496
        %v609 = vpack.c.b16 %v501, %v497
        %v610 = vpack.c.b16 %v502, %v498
        %v611 = vpack.c.b16 %v503, %v499
        %v612 = vpack.c.b16 %v508, %v504
        %v613 = vpack.c.b16 %v509, %v505
        %v614 = vpack.c.b16 %v510, %v506
        %v615 = vpack.c.b16 %v511, %v507
        %v616 = vpack.c.b16 %v516, %v512
        %v617 = vpack.c.b16 %v517, %v513
        %v618 = vpack.c.b16 %v518, %v514
        %v619 = vpack.c.b16 %v519, %v515
        %v620 = vpack.c.b16 %v524, %v520
        %v621 = vpack.c.b16 %v525, %v521
        %v622 = vpack.c.b16 %v526, %v522
        %v623 = vpack.c.b16 %v527, %v523
        %v624 = vpack.c.b16 %v532, %v528
        %v625 = vpack.c.b16 %v533, %v529
        %v626 = vpack.c.b16 %v534, %v530
        %v627 = vpack.c.b16 %v535, %v531
        %v628 = vpack.c.b16 %v540, %v536
        %v629 = vpack.c.b16 %v541, %v537
        %v630 = vpack.c.b16 %v542, %v538
        %v631 = vpack.c.b16 %v543, %v539
        %v632 = vpack.c.b16 %v548, %v544
        %v633 = vpack.c.b16 %v549, %v545
        %v634 = vpack.c.b16 %v550, %v546
        %v635 = vpack.c.b16 %v551, %v547
        %v636 = vpack.c.b16 %v556, %v552
        %v637 = vpack.c.b16 %v557, %v553
        %v638 = vpack.c.b16 %v558, %v554
        %v639 = vpack.c.b16 %v559, %v555
        %v640 = vpack.c.b16 %v564, %v560
        %v641 = vpack.c.b16 %v565, %v561
        %v642 = vpack.c.b16 %v566, %v562
        %v643 = vpack.c.b16 %v567, %v563
        %v644 = vpack.c.b16 %v572, %v568
        %v645 = vpack.c.b16 %v573, %v569
        %v646 = vpack.c.b16 %v574, %v570
        %v647 = vpack.c.b16 %v575, %v571
        %v648 = vpack.c.b16 %v580, %v576
        %v649 = vpack.c.b16 %v581, %v577
        %v650 = vpack.c.b16 %v582, %v578
        %v651 = vpack.c.b16 %v583, %v579
        %v652 = vpack.c.b16 %v588, %v584
        %v653 = vpack.c.b16 %v589, %v585
        %v654 = vpack.c.b16 %v590, %v586
        %v655 = vpack.c.b16 %v591, %v587
        %720 = vmatpush.bf16.msra.mxu0 %v620
        %721 = vmatpush.bf16.msra.mxu0 %v616
        %722 = vmatpush.bf16.msra.mxu0 %v612
        %723 = vmatpush.bf16.msra.mxu0 %v608
        %724 = vmatpush.bf16.msra.mxu0 %v604
        %725 = vmatpush.bf16.msra.mxu0 %v600
        %726 = vmatpush.bf16.msra.mxu0 %v596
        %727 = vmatpush.bf16.msra.mxu0 %v592
        %728 = vmatmul.bf16.gmra.mxu0 %v322
        %v729 = vpop.f32.mrf.mxu0
        %v730 = vadd.f32 %v392, %v729
        %v731 = vpop.f32.mrf.mxu0
        %v732 = vadd.f32 %v392, %v731
        %733 = vmatmul.bf16.gmra.mxu0 %v324
        %v734 = vpop.f32.mrf.mxu0
        %v735 = vadd.f32 %v392, %v734
        %v736 = vpop.f32.mrf.mxu0
        %v737 = vadd.f32 %v392, %v736
        %738 = vdwg.mxu0
        %739 = vmatpush.bf16.msra.mxu0 %v652
        %740 = vmatpush.bf16.msra.mxu0 %v648
        %741 = vmatpush.bf16.msra.mxu0 %v644
        %742 = vmatpush.bf16.msra.mxu0 %v640
        %743 = vmatpush.bf16.msra.mxu0 %v636
        %744 = vmatpush.bf16.msra.mxu0 %v632
        %745 = vmatpush.bf16.msra.mxu0 %v628
        %746 = vmatpush.bf16.msra.mxu0 %v624
        %747 = vmatmul.bf16.gmra.mxu0 %v323
        %v748 = vpop.f32.mrf.mxu0
        %v749 = vadd.f32 %v730, %v748
        %v750 = vpop.f32.mrf.mxu0
        %v751 = vadd.f32 %v732, %v750
        %752 = vmatmul.bf16.gmra.mxu0 %v325
        %v753 = vpop.f32.mrf.mxu0
        %v754 = vadd.f32 %v735, %v753
        %v755 = vpop.f32.mrf.mxu0
        %v756 = vadd.f32 %v737, %v755
        %757 = vdwg.mxu0
        %758 = vmatpush.bf16.msra.mxu0 %v621
        %759 = vmatpush.bf16.msra.mxu0 %v617
        %760 = vmatpush.bf16.msra.mxu0 %v613
        %761 = vmatpush.bf16.msra.mxu0 %v609
        %762 = vmatpush.bf16.msra.mxu0 %v605
        %763 = vmatpush.bf16.msra.mxu0 %v601
        %764 = vmatpush.bf16.msra.mxu0 %v597
        %765 = vmatpush.bf16.msra.mxu0 %v593
        %766 = vmatmul.bf16.gmra.mxu0 %v322
        %v767 = vpop.f32.mrf.mxu0
        %v768 = vadd.f32 %v393, %v767
        %v769 = vpop.f32.mrf.mxu0
        %v770 = vadd.f32 %v393, %v769
        %771 = vmatmul.bf16.gmra.mxu0 %v324
        %v772 = vpop.f32.mrf.mxu0
        %v773 = vadd.f32 %v393, %v772
        %v774 = vpop.f32.mrf.mxu0
        %v775 = vadd.f32 %v393, %v774
        %776 = vdwg.mxu0
        %777 = vmatpush.bf16.msra.mxu0 %v653
        %778 = vmatpush.bf16.msra.mxu0 %v649
        %779 = vmatpush.bf16.msra.mxu0 %v645
        %780 = vmatpush.bf16.msra.mxu0 %v641
        %781 = vmatpush.bf16.msra.mxu0 %v637
        %782 = vmatpush.bf16.msra.mxu0 %v633
        %783 = vmatpush.bf16.msra.mxu0 %v629
        %784 = vmatpush.bf16.msra.mxu0 %v625
        %785 = vmatmul.bf16.gmra.mxu0 %v323
        %v786 = vpop.f32.mrf.mxu0
        %v787 = vadd.f32 %v768, %v786
        %v788 = vpop.f32.mrf.mxu0
        %v789 = vadd.f32 %v770, %v788
        %790 = vmatmul.bf16.gmra.mxu0 %v325
        %v791 = vpop.f32.mrf.mxu0
        %v792 = vadd.f32 %v773, %v791
        %v793 = vpop.f32.mrf.mxu0
        %v794 = vadd.f32 %v775, %v793
        %795 = vdwg.mxu0
        %796 = vmatpush.bf16.msra.mxu0 %v622
        %797 = vmatpush.bf16.msra.mxu0 %v618
        %798 = vmatpush.bf16.msra.mxu0 %v614
        %799 = vmatpush.bf16.msra.mxu0 %v610
        %800 = vmatpush.bf16.msra.mxu0 %v606
        %801 = vmatpush.bf16.msra.mxu0 %v602
        %802 = vmatpush.bf16.msra.mxu0 %v598
        %803 = vmatpush.bf16.msra.mxu0 %v594
        %804 = vmatmul.bf16.gmra.mxu0 %v322
        %v805 = vpop.f32.mrf.mxu0
        %v806 = vadd.f32 %v394, %v805
        %v807 = vpop.f32.mrf.mxu0
        %v808 = vadd.f32 %v394, %v807
        %809 = vmatmul.bf16.gmra.mxu0 %v324
        %v810 = vpop.f32.mrf.mxu0
        %v811 = vadd.f32 %v394, %v810
        %v812 = vpop.f32.mrf.mxu0
        %v813 = vadd.f32 %v394, %v812
        %814 = vdwg.mxu0
        %815 = vmatpush.bf16.msra.mxu0 %v654
        %816 = vmatpush.bf16.msra.mxu0 %v650
        %817 = vmatpush.bf16.msra.mxu0 %v646
        %818 = vmatpush.bf16.msra.mxu0 %v642
        %819 = vmatpush.bf16.msra.mxu0 %v638
        %820 = vmatpush.bf16.msra.mxu0 %v634
        %821 = vmatpush.bf16.msra.mxu0 %v630
        %822 = vmatpush.bf16.msra.mxu0 %v626
        %823 = vmatmul.bf16.gmra.mxu0 %v323
        %v824 = vpop.f32.mrf.mxu0
        %v825 = vadd.f32 %v806, %v824
        %v826 = vpop.f32.mrf.mxu0
        %v827 = vadd.f32 %v808, %v826
        %828 = vmatmul.bf16.gmra.mxu0 %v325
        %v829 = vpop.f32.mrf.mxu0
        %v830 = vadd.f32 %v811, %v829
        %v831 = vpop.f32.mrf.mxu0
        %v832 = vadd.f32 %v813, %v831
        %833 = vdwg.mxu0
        %834 = vmatpush.bf16.msra.mxu0 %v623
        %835 = vmatpush.bf16.msra.mxu0 %v619
        %836 = vmatpush.bf16.msra.mxu0 %v615
        %837 = vmatpush.bf16.msra.mxu0 %v611
        %838 = vmatpush.bf16.msra.mxu0 %v607
        %839 = vmatpush.bf16.msra.mxu0 %v603
        %840 = vmatpush.bf16.msra.mxu0 %v599
        %841 = vmatpush.bf16.msra.mxu0 %v595
        %842 = vmatmul.bf16.gmra.mxu0 %v322
        %v843 = vpop.f32.mrf.mxu0
        %v844 = vadd.f32 %v395, %v843
        %v845 = vpop.f32.mrf.mxu0
        %v846 = vadd.f32 %v395, %v845
        %847 = vmatmul.bf16.gmra.mxu0 %v324
        %v848 = vpop.f32.mrf.mxu0
        %v849 = vadd.f32 %v395, %v848
        %v850 = vpop.f32.mrf.mxu0
        %v851 = vadd.f32 %v395, %v850
        %852 = vdwg.mxu0
        %853 = vmatpush.bf16.msra.mxu0 %v655
        %854 = vmatpush.bf16.msra.mxu0 %v651
        %855 = vmatpush.bf16.msra.mxu0 %v647
        %856 = vmatpush.bf16.msra.mxu0 %v643
        %857 = vmatpush.bf16.msra.mxu0 %v639
        %858 = vmatpush.bf16.msra.mxu0 %v635
        %859 = vmatpush.bf16.msra.mxu0 %v631
        %860 = vmatpush.bf16.msra.mxu0 %v627
        %861 = vmatmul.bf16.gmra.mxu0 %v323
        %v862 = vpop.f32.mrf.mxu0
        %v863 = vadd.f32 %v844, %v862
        %v864 = vpop.f32.mrf.mxu0
        %v865 = vadd.f32 %v846, %v864
        %866 = vmatmul.bf16.gmra.mxu0 %v325
        %v867 = vpop.f32.mrf.mxu0
        %v868 = vadd.f32 %v849, %v867
        %v869 = vpop.f32.mrf.mxu0
        %v870 = vadd.f32 %v851, %v869
        %871 = vdwg.mxu0
        %v872 = vmax.f32 %v749, 0.0
        %v873 = vmax.f32 %v787, 0.0
        %v874 = vmax.f32 %v825, 0.0
        %v875 = vmax.f32 %v863, 0.0
        %v876 = vmax.f32 %v751, 0.0
        %v877 = vmax.f32 %v789, 0.0
        %v878 = vmax.f32 %v827, 0.0
        %v879 = vmax.f32 %v865, 0.0
        %v880 = vmax.f32 %v754, 0.0
        %v881 = vmax.f32 %v792, 0.0
        %v882 = vmax.f32 %v830, 0.0
        %v883 = vmax.f32 %v868, 0.0
        %v884 = vmax.f32 %v756, 0.0
        %v885 = vmax.f32 %v794, 0.0
        %v886 = vmax.f32 %v832, 0.0
        %v887 = vmax.f32 %v870, 0.0
        %v888 = vpack.c.bf16 %v876, %v872
        %v889 = vpack.c.bf16 %v877, %v873
        %v890 = vpack.c.bf16 %v878, %v874
        %v891 = vpack.c.bf16 %v879, %v875
        %v892 = vpack.c.bf16 %v884, %v880
        %v893 = vpack.c.bf16 %v885, %v881
        %v894 = vpack.c.bf16 %v886, %v882
        %v895 = vpack.c.bf16 %v887, %v883
        %v896 = vld [vmem:[#allocation8] sm:$0xff]
        %v897 = vld [vmem:[#allocation8 + $0x8] sm:$0xff]
        %v898 = vld [vmem:[#allocation8 + $0x10] sm:$0xff]
        %v899 = vld [vmem:[#allocation8 + $0x18] sm:$0xff]
        %v900 = vld [vmem:[#allocation8 + $0x20] sm:$0xff]
        %v901 = vld [vmem:[#allocation8 + $0x28] sm:$0xff]
        %v902 = vld [vmem:[#allocation8 + $0x30] sm:$0xff]
        %v903 = vld [vmem:[#allocation8 + $0x38] sm:$0xff]
        %v904 = vld [vmem:[#allocation8 + $0x40] sm:$0xff]
        %v905 = vld [vmem:[#allocation8 + $0x48] sm:$0xff]
        %v906 = vld [vmem:[#allocation8 + $0x50] sm:$0xff]
        %v907 = vld [vmem:[#allocation8 + $0x58] sm:$0xff]
        %v908 = vld [vmem:[#allocation8 + $0x60] sm:$0xff]
        %v909 = vld [vmem:[#allocation8 + $0x68] sm:$0xff]
        %v910 = vld [vmem:[#allocation8 + $0x70] sm:$0xff]
        %v911 = vld [vmem:[#allocation8 + $0x78] sm:$0xff]
        %v912 = vld [vmem:[#allocation8 + $0x80] sm:$0xff]
        %v913 = vld [vmem:[#allocation8 + $0x88] sm:$0xff]
        %v914 = vld [vmem:[#allocation8 + $0x90] sm:$0xff]
        %v915 = vld [vmem:[#allocation8 + $0x98] sm:$0xff]
        %v916 = vld [vmem:[#allocation8 + $0xa0] sm:$0xff]
        %v917 = vld [vmem:[#allocation8 + $0xa8] sm:$0xff]
        %v918 = vld [vmem:[#allocation8 + $0xb0] sm:$0xff]
        %v919 = vld [vmem:[#allocation8 + $0xb8] sm:$0xff]
        %v920 = vld [vmem:[#allocation8 + $0xc0] sm:$0xff]
        %v921 = vld [vmem:[#allocation8 + $0xc8] sm:$0xff]
        %v922 = vld [vmem:[#allocation8 + $0xd0] sm:$0xff]
        %v923 = vld [vmem:[#allocation8 + $0xd8] sm:$0xff]
        %v924 = vld [vmem:[#allocation8 + $0xe0] sm:$0xff]
        %v925 = vld [vmem:[#allocation8 + $0xe8] sm:$0xff]
        %v926 = vld [vmem:[#allocation8 + $0xf0] sm:$0xff]
        %v927 = vld [vmem:[#allocation8 + $0xf8] sm:$0xff]
        %v928 = vld [vmem:[#allocation8 + $0x100] sm:$0xff]
        %v929 = vld [vmem:[#allocation8 + $0x108] sm:$0xff]
        %v930 = vld [vmem:[#allocation8 + $0x110] sm:$0xff]
        %v931 = vld [vmem:[#allocation8 + $0x118] sm:$0xff]
        %v932 = vld [vmem:[#allocation8 + $0x120] sm:$0xff]
        %v933 = vld [vmem:[#allocation8 + $0x128] sm:$0xff]
        %v934 = vld [vmem:[#allocation8 + $0x130] sm:$0xff]
        %v935 = vld [vmem:[#allocation8 + $0x138] sm:$0xff]
        %v936 = vld [vmem:[#allocation8 + $0x140] sm:$0xff]
        %v937 = vld [vmem:[#allocation8 + $0x148] sm:$0xff]
        %v938 = vld [vmem:[#allocation8 + $0x150] sm:$0xff]
        %v939 = vld [vmem:[#allocation8 + $0x158] sm:$0xff]
        %v940 = vld [vmem:[#allocation8 + $0x160] sm:$0xff]
        %v941 = vld [vmem:[#allocation8 + $0x168] sm:$0xff]
        %v942 = vld [vmem:[#allocation8 + $0x170] sm:$0xff]
        %v943 = vld [vmem:[#allocation8 + $0x178] sm:$0xff]
        %v944 = vld [vmem:[#allocation8 + $0x180] sm:$0xff]
        %v945 = vld [vmem:[#allocation8 + $0x188] sm:$0xff]
        %v946 = vld [vmem:[#allocation8 + $0x190] sm:$0xff]
        %v947 = vld [vmem:[#allocation8 + $0x198] sm:$0xff]
        %v948 = vld [vmem:[#allocation8 + $0x1a0] sm:$0xff]
        %v949 = vld [vmem:[#allocation8 + $0x1a8] sm:$0xff]
        %v950 = vld [vmem:[#allocation8 + $0x1b0] sm:$0xff]
        %v951 = vld [vmem:[#allocation8 + $0x1b8] sm:$0xff]
        %v952 = vld [vmem:[#allocation8 + $0x1c0] sm:$0xff]
        %v953 = vld [vmem:[#allocation8 + $0x1c8] sm:$0xff]
        %v954 = vld [vmem:[#allocation8 + $0x1d0] sm:$0xff]
        %v955 = vld [vmem:[#allocation8 + $0x1d8] sm:$0xff]
        %v956 = vld [vmem:[#allocation8 + $0x1e0] sm:$0xff]
        %v957 = vld [vmem:[#allocation8 + $0x1e8] sm:$0xff]
        %v958 = vld [vmem:[#allocation8 + $0x1f0] sm:$0xff]
        %v959 = vld [vmem:[#allocation8 + $0x1f8] sm:$0xff]
        %v960 = vld [vmem:[%s4] sm:$0x3]
        %v962 = vperm.slane %v960, 0
        %v963 = vperm.slane %v960, 1
        %v1030 = vunpack.c.l.b16 %v896
        %v1031 = vunpack.c.h.b16 %v896
        %v1032 = vunpack.c.l.b16 %v897
        %v1033 = vunpack.c.h.b16 %v897
        %v1034 = vunpack.c.l.b16 %v898
        %v1035 = vunpack.c.h.b16 %v898
        %v1036 = vunpack.c.l.b16 %v899
        %v1037 = vunpack.c.h.b16 %v899
        %v1038 = vunpack.c.l.b16 %v900
        %v1039 = vunpack.c.h.b16 %v900
        %v1040 = vunpack.c.l.b16 %v901
        %v1041 = vunpack.c.h.b16 %v901
        %v1042 = vunpack.c.l.b16 %v902
        %v1043 = vunpack.c.h.b16 %v902
        %v1044 = vunpack.c.l.b16 %v903
        %v1045 = vunpack.c.h.b16 %v903
        %v1046 = vunpack.c.l.b16 %v904
        %v1047 = vunpack.c.h.b16 %v904
        %v1048 = vunpack.c.l.b16 %v905
        %v1049 = vunpack.c.h.b16 %v905
        %v1050 = vunpack.c.l.b16 %v906
        %v1051 = vunpack.c.h.b16 %v906
        %v1052 = vunpack.c.l.b16 %v907
        %v1053 = vunpack.c.h.b16 %v907
        %v1054 = vunpack.c.l.b16 %v908
        %v1055 = vunpack.c.h.b16 %v908
        %v1056 = vunpack.c.l.b16 %v909
        %v1057 = vunpack.c.h.b16 %v909
        %v1058 = vunpack.c.l.b16 %v910
        %v1059 = vunpack.c.h.b16 %v910
        %v1060 = vunpack.c.l.b16 %v911
        %v1061 = vunpack.c.h.b16 %v911
        %v1062 = vunpack.c.l.b16 %v912
        %v1063 = vunpack.c.h.b16 %v912
        %v1064 = vunpack.c.l.b16 %v913
        %v1065 = vunpack.c.h.b16 %v913
        %v1066 = vunpack.c.l.b16 %v914
        %v1067 = vunpack.c.h.b16 %v914
        %v1068 = vunpack.c.l.b16 %v915
        %v1069 = vunpack.c.h.b16 %v915
        %v1070 = vunpack.c.l.b16 %v916
        %v1071 = vunpack.c.h.b16 %v916
        %v1072 = vunpack.c.l.b16 %v917
        %v1073 = vunpack.c.h.b16 %v917
        %v1074 = vunpack.c.l.b16 %v918
        %v1075 = vunpack.c.h.b16 %v918
        %v1076 = vunpack.c.l.b16 %v919
        %v1077 = vunpack.c.h.b16 %v919
        %v1078 = vunpack.c.l.b16 %v920
        %v1079 = vunpack.c.h.b16 %v920
        %v1080 = vunpack.c.l.b16 %v921
        %v1081 = vunpack.c.h.b16 %v921
        %v1082 = vunpack.c.l.b16 %v922
        %v1083 = vunpack.c.h.b16 %v922
        %v1084 = vunpack.c.l.b16 %v923
        %v1085 = vunpack.c.h.b16 %v923
        %v1086 = vunpack.c.l.b16 %v924
        %v1087 = vunpack.c.h.b16 %v924
        %v1088 = vunpack.c.l.b16 %v925
        %v1089 = vunpack.c.h.b16 %v925
        %v1090 = vunpack.c.l.b16 %v926
        %v1091 = vunpack.c.h.b16 %v926
        %v1092 = vunpack.c.l.b16 %v927
        %v1093 = vunpack.c.h.b16 %v927
        %v1094 = vunpack.c.l.b16 %v928
        %v1095 = vunpack.c.h.b16 %v928
        %v1096 = vunpack.c.l.b16 %v929
        %v1097 = vunpack.c.h.b16 %v929
        %v1098 = vunpack.c.l.b16 %v930
        %v1099 = vunpack.c.h.b16 %v930
        %v1100 = vunpack.c.l.b16 %v931
        %v1101 = vunpack.c.h.b16 %v931
        %v1102 = vunpack.c.l.b16 %v932
        %v1103 = vunpack.c.h.b16 %v932
        %v1104 = vunpack.c.l.b16 %v933
        %v1105 = vunpack.c.h.b16 %v933
        %v1106 = vunpack.c.l.b16 %v934
        %v1107 = vunpack.c.h.b16 %v934
        %v1108 = vunpack.c.l.b16 %v935
        %v1109 = vunpack.c.h.b16 %v935
        %v1110 = vunpack.c.l.b16 %v936
        %v1111 = vunpack.c.h.b16 %v936
        %v1112 = vunpack.c.l.b16 %v937
        %v1113 = vunpack.c.h.b16 %v937
        %v1114 = vunpack.c.l.b16 %v938
        %v1115 = vunpack.c.h.b16 %v938
        %v1116 = vunpack.c.l.b16 %v939
        %v1117 = vunpack.c.h.b16 %v939
        %v1118 = vunpack.c.l.b16 %v940
        %v1119 = vunpack.c.h.b16 %v940
        %v1120 = vunpack.c.l.b16 %v941
        %v1121 = vunpack.c.h.b16 %v941
        %v1122 = vunpack.c.l.b16 %v942
        %v1123 = vunpack.c.h.b16 %v942
        %v1124 = vunpack.c.l.b16 %v943
        %v1125 = vunpack.c.h.b16 %v943
        %v1126 = vunpack.c.l.b16 %v944
        %v1127 = vunpack.c.h.b16 %v944
        %v1128 = vunpack.c.l.b16 %v945
        %v1129 = vunpack.c.h.b16 %v945
        %v1130 = vunpack.c.l.b16 %v946
        %v1131 = vunpack.c.h.b16 %v946
        %v1132 = vunpack.c.l.b16 %v947
        %v1133 = vunpack.c.h.b16 %v947
        %v1134 = vunpack.c.l.b16 %v948
        %v1135 = vunpack.c.h.b16 %v948
        %v1136 = vunpack.c.l.b16 %v949
        %v1137 = vunpack.c.h.b16 %v949
        %v1138 = vunpack.c.l.b16 %v950
        %v1139 = vunpack.c.h.b16 %v950
        %v1140 = vunpack.c.l.b16 %v951
        %v1141 = vunpack.c.h.b16 %v951
        %v1142 = vunpack.c.l.b16 %v952
        %v1143 = vunpack.c.h.b16 %v952
        %v1144 = vunpack.c.l.b16 %v953
        %v1145 = vunpack.c.h.b16 %v953
        %v1146 = vunpack.c.l.b16 %v954
        %v1147 = vunpack.c.h.b16 %v954
        %v1148 = vunpack.c.l.b16 %v955
        %v1149 = vunpack.c.h.b16 %v955
        %v1150 = vunpack.c.l.b16 %v956
        %v1151 = vunpack.c.h.b16 %v956
        %v1152 = vunpack.c.l.b16 %v957
        %v1153 = vunpack.c.h.b16 %v957
        %v1154 = vunpack.c.l.b16 %v958
        %v1155 = vunpack.c.h.b16 %v958
        %v1156 = vunpack.c.l.b16 %v959
        %v1157 = vunpack.c.h.b16 %v959
        %v1158 = vpack.c.b16 %v1032, %v1030
        %v1159 = vpack.c.b16 %v1033, %v1031
        %v1160 = vpack.c.b16 %v1036, %v1034
        %v1161 = vpack.c.b16 %v1037, %v1035
        %v1162 = vpack.c.b16 %v1040, %v1038
        %v1163 = vpack.c.b16 %v1041, %v1039
        %v1164 = vpack.c.b16 %v1044, %v1042
        %v1165 = vpack.c.b16 %v1045, %v1043
        %v1166 = vpack.c.b16 %v1048, %v1046
        %v1167 = vpack.c.b16 %v1049, %v1047
        %v1168 = vpack.c.b16 %v1052, %v1050
        %v1169 = vpack.c.b16 %v1053, %v1051
        %v1170 = vpack.c.b16 %v1056, %v1054
        %v1171 = vpack.c.b16 %v1057, %v1055
        %v1172 = vpack.c.b16 %v1060, %v1058
        %v1173 = vpack.c.b16 %v1061, %v1059
        %v1174 = vpack.c.b16 %v1064, %v1062
        %v1175 = vpack.c.b16 %v1065, %v1063
        %v1176 = vpack.c.b16 %v1068, %v1066
        %v1177 = vpack.c.b16 %v1069, %v1067
        %v1178 = vpack.c.b16 %v1072, %v1070
        %v1179 = vpack.c.b16 %v1073, %v1071
        %v1180 = vpack.c.b16 %v1076, %v1074
        %v1181 = vpack.c.b16 %v1077, %v1075
        %v1182 = vpack.c.b16 %v1080, %v1078
        %v1183 = vpack.c.b16 %v1081, %v1079
        %v1184 = vpack.c.b16 %v1084, %v1082
        %v1185 = vpack.c.b16 %v1085, %v1083
        %v1186 = vpack.c.b16 %v1088, %v1086
        %v1187 = vpack.c.b16 %v1089, %v1087
        %v1188 = vpack.c.b16 %v1092, %v1090
        %v1189 = vpack.c.b16 %v1093, %v1091
        %v1190 = vpack.c.b16 %v1096, %v1094
        %v1191 = vpack.c.b16 %v1097, %v1095
        %v1192 = vpack.c.b16 %v1100, %v1098
        %v1193 = vpack.c.b16 %v1101, %v1099
        %v1194 = vpack.c.b16 %v1104, %v1102
        %v1195 = vpack.c.b16 %v1105, %v1103
        %v1196 = vpack.c.b16 %v1108, %v1106
        %v1197 = vpack.c.b16 %v1109, %v1107
        %v1198 = vpack.c.b16 %v1112, %v1110
        %v1199 = vpack.c.b16 %v1113, %v1111
        %v1200 = vpack.c.b16 %v1116, %v1114
        %v1201 = vpack.c.b16 %v1117, %v1115
        %v1202 = vpack.c.b16 %v1120, %v1118
        %v1203 = vpack.c.b16 %v1121, %v1119
        %v1204 = vpack.c.b16 %v1124, %v1122
        %v1205 = vpack.c.b16 %v1125, %v1123
        %v1206 = vpack.c.b16 %v1128, %v1126
        %v1207 = vpack.c.b16 %v1129, %v1127
        %v1208 = vpack.c.b16 %v1132, %v1130
        %v1209 = vpack.c.b16 %v1133, %v1131
        %v1210 = vpack.c.b16 %v1136, %v1134
        %v1211 = vpack.c.b16 %v1137, %v1135
        %v1212 = vpack.c.b16 %v1140, %v1138
        %v1213 = vpack.c.b16 %v1141, %v1139
        %v1214 = vpack.c.b16 %v1144, %v1142
        %v1215 = vpack.c.b16 %v1145, %v1143
        %v1216 = vpack.c.b16 %v1148, %v1146
        %v1217 = vpack.c.b16 %v1149, %v1147
        %v1218 = vpack.c.b16 %v1152, %v1150
        %v1219 = vpack.c.b16 %v1153, %v1151
        %v1220 = vpack.c.b16 %v1156, %v1154
        %v1221 = vpack.c.b16 %v1157, %v1155
        %1286 = vmatpush.bf16.msra.mxu0 %v1172
        %1287 = vmatpush.bf16.msra.mxu0 %v1170
        %1288 = vmatpush.bf16.msra.mxu0 %v1168
        %1289 = vmatpush.bf16.msra.mxu0 %v1166
        %1290 = vmatpush.bf16.msra.mxu0 %v1164
        %1291 = vmatpush.bf16.msra.mxu0 %v1162
        %1292 = vmatpush.bf16.msra.mxu0 %v1160
        %1293 = vmatpush.bf16.msra.mxu0 %v1158
        %1294 = vmatmul.bf16.gmra.mxu0 %v888
        %v1295 = vpop.f32.mrf.mxu0
        %v1296 = vadd.f32 %v962, %v1295
        %v1297 = vpop.f32.mrf.mxu0
        %v1298 = vadd.f32 %v962, %v1297
        %1299 = vmatmul.bf16.gmra.mxu0 %v892
        %v1300 = vpop.f32.mrf.mxu0
        %v1301 = vadd.f32 %v962, %v1300
        %v1302 = vpop.f32.mrf.mxu0
        %v1303 = vadd.f32 %v962, %v1302
        %1304 = vdwg.mxu0
        %1305 = vmatpush.bf16.msra.mxu0 %v1188
        %1306 = vmatpush.bf16.msra.mxu0 %v1186
        %1307 = vmatpush.bf16.msra.mxu0 %v1184
        %1308 = vmatpush.bf16.msra.mxu0 %v1182
        %1309 = vmatpush.bf16.msra.mxu0 %v1180
        %1310 = vmatpush.bf16.msra.mxu0 %v1178
        %1311 = vmatpush.bf16.msra.mxu0 %v1176
        %1312 = vmatpush.bf16.msra.mxu0 %v1174
        %1313 = vmatmul.bf16.gmra.mxu0 %v889
        %v1314 = vpop.f32.mrf.mxu0
        %v1315 = vadd.f32 %v1296, %v1314
        %v1316 = vpop.f32.mrf.mxu0
        %v1317 = vadd.f32 %v1298, %v1316
        %1318 = vmatmul.bf16.gmra.mxu0 %v893
        %v1319 = vpop.f32.mrf.mxu0
        %v1320 = vadd.f32 %v1301, %v1319
        %v1321 = vpop.f32.mrf.mxu0
        %v1322 = vadd.f32 %v1303, %v1321
        %1323 = vdwg.mxu0
        %1324 = vmatpush.bf16.msra.mxu0 %v1204
        %1325 = vmatpush.bf16.msra.mxu0 %v1202
        %1326 = vmatpush.bf16.msra.mxu0 %v1200
        %1327 = vmatpush.bf16.msra.mxu0 %v1198
        %1328 = vmatpush.bf16.msra.mxu0 %v1196
        %1329 = vmatpush.bf16.msra.mxu0 %v1194
        %1330 = vmatpush.bf16.msra.mxu0 %v1192
        %1331 = vmatpush.bf16.msra.mxu0 %v1190
        %1332 = vmatmul.bf16.gmra.mxu0 %v890
        %v1333 = vpop.f32.mrf.mxu0
        %v1334 = vadd.f32 %v1315, %v1333
        %v1335 = vpop.f32.mrf.mxu0
        %v1336 = vadd.f32 %v1317, %v1335
        %1337 = vmatmul.bf16.gmra.mxu0 %v894
        %v1338 = vpop.f32.mrf.mxu0
        %v1339 = vadd.f32 %v1320, %v1338
        %v1340 = vpop.f32.mrf.mxu0
        %v1341 = vadd.f32 %v1322, %v1340
        %1342 = vdwg.mxu0
        %1343 = vmatpush.bf16.msra.mxu0 %v1220
        %1344 = vmatpush.bf16.msra.mxu0 %v1218
        %1345 = vmatpush.bf16.msra.mxu0 %v1216
        %1346 = vmatpush.bf16.msra.mxu0 %v1214
        %1347 = vmatpush.bf16.msra.mxu0 %v1212
        %1348 = vmatpush.bf16.msra.mxu0 %v1210
        %1349 = vmatpush.bf16.msra.mxu0 %v1208
        %1350 = vmatpush.bf16.msra.mxu0 %v1206
        %1351 = vmatmul.bf16.gmra.mxu0 %v891
        %v1352 = vpop.f32.mrf.mxu0
        %v1353 = vadd.f32 %v1334, %v1352
        %v1354 = vpop.f32.mrf.mxu0
        %v1355 = vadd.f32 %v1336, %v1354
        %1356 = vmatmul.bf16.gmra.mxu0 %v895
        %v1357 = vpop.f32.mrf.mxu0
        %v1358 = vadd.f32 %v1339, %v1357
        %v1359 = vpop.f32.mrf.mxu0
        %v1360 = vadd.f32 %v1341, %v1359
        %1361 = vdwg.mxu0
        %1362 = vmatpush.bf16.msra.mxu0 %v1173
        %1363 = vmatpush.bf16.msra.mxu0 %v1171
        %1364 = vmatpush.bf16.msra.mxu0 %v1169
        %1365 = vmatpush.bf16.msra.mxu0 %v1167
        %1366 = vmatpush.bf16.msra.mxu0 %v1165
        %1367 = vmatpush.bf16.msra.mxu0 %v1163
        %1368 = vmatpush.bf16.msra.mxu0 %v1161
        %1369 = vmatpush.bf16.msra.mxu0 %v1159
        %1370 = vmatmul.bf16.gmra.mxu0 %v888
        %v1371 = vpop.f32.mrf.mxu0
        %v1372 = vadd.f32 %v963, %v1371
        %v1373 = vpop.f32.mrf.mxu0
        %v1374 = vadd.f32 %v963, %v1373
        %1375 = vmatmul.bf16.gmra.mxu0 %v892
        %v1376 = vpop.f32.mrf.mxu0
        %v1377 = vadd.f32 %v963, %v1376
        %v1378 = vpop.f32.mrf.mxu0
        %v1379 = vadd.f32 %v963, %v1378
        %1380 = vdwg.mxu0
        %1381 = vmatpush.bf16.msra.mxu0 %v1189
        %1382 = vmatpush.bf16.msra.mxu0 %v1187
        %1383 = vmatpush.bf16.msra.mxu0 %v1185
        %1384 = vmatpush.bf16.msra.mxu0 %v1183
        %1385 = vmatpush.bf16.msra.mxu0 %v1181
        %1386 = vmatpush.bf16.msra.mxu0 %v1179
        %1387 = vmatpush.bf16.msra.mxu0 %v1177
        %1388 = vmatpush.bf16.msra.mxu0 %v1175
        %1389 = vmatmul.bf16.gmra.mxu0 %v889
        %v1390 = vpop.f32.mrf.mxu0
        %v1391 = vadd.f32 %v1372, %v1390
        %v1392 = vpop.f32.mrf.mxu0
        %v1393 = vadd.f32 %v1374, %v1392
        %1394 = vmatmul.bf16.gmra.mxu0 %v893
        %v1395 = vpop.f32.mrf.mxu0
        %v1396 = vadd.f32 %v1377, %v1395
        %v1397 = vpop.f32.mrf.mxu0
        %v1398 = vadd.f32 %v1379, %v1397
        %1399 = vdwg.mxu0
        %1400 = vmatpush.bf16.msra.mxu0 %v1205
        %1401 = vmatpush.bf16.msra.mxu0 %v1203
        %1402 = vmatpush.bf16.msra.mxu0 %v1201
        %1403 = vmatpush.bf16.msra.mxu0 %v1199
        %1404 = vmatpush.bf16.msra.mxu0 %v1197
        %1405 = vmatpush.bf16.msra.mxu0 %v1195
        %1406 = vmatpush.bf16.msra.mxu0 %v1193
        %1407 = vmatpush.bf16.msra.mxu0 %v1191
        %1408 = vmatmul.bf16.gmra.mxu0 %v890
        %v1409 = vpop.f32.mrf.mxu0
        %v1410 = vadd.f32 %v1391, %v1409
        %v1411 = vpop.f32.mrf.mxu0
        %v1412 = vadd.f32 %v1393, %v1411
        %1413 = vmatmul.bf16.gmra.mxu0 %v894
        %v1414 = vpop.f32.mrf.mxu0
        %v1415 = vadd.f32 %v1396, %v1414
        %v1416 = vpop.f32.mrf.mxu0
        %v1417 = vadd.f32 %v1398, %v1416
        %1418 = vdwg.mxu0
        %1419 = vmatpush.bf16.msra.mxu0 %v1221
        %1420 = vmatpush.bf16.msra.mxu0 %v1219
        %1421 = vmatpush.bf16.msra.mxu0 %v1217
        %1422 = vmatpush.bf16.msra.mxu0 %v1215
        %1423 = vmatpush.bf16.msra.mxu0 %v1213
        %1424 = vmatpush.bf16.msra.mxu0 %v1211
        %1425 = vmatpush.bf16.msra.mxu0 %v1209
        %1426 = vmatpush.bf16.msra.mxu0 %v1207
        %1427 = vmatmul.bf16.gmra.mxu0 %v891
        %v1428 = vpop.f32.mrf.mxu0
        %v1429 = vadd.f32 %v1410, %v1428
        %v1430 = vpop.f32.mrf.mxu0
        %v1431 = vadd.f32 %v1412, %v1430
        %1432 = vmatmul.bf16.gmra.mxu0 %v895
        %v1433 = vpop.f32.mrf.mxu0
        %v1434 = vadd.f32 %v1415, %v1433
        %v1435 = vpop.f32.mrf.mxu0
        %v1436 = vadd.f32 %v1417, %v1435
        %1437 = vdwg.mxu0
        %v1438 = vmax.f32 %v1353, 0.0
        %v1439 = vmax.f32 %v1429, 0.0
        %v1440 = vmax.f32 %v1355, 0.0
        %v1441 = vmax.f32 %v1431, 0.0
        %v1442 = vmax.f32 %v1358, 0.0
        %v1443 = vmax.f32 %v1434, 0.0
        %v1444 = vmax.f32 %v1360, 0.0
        %v1445 = vmax.f32 %v1436, 0.0
        %1446 = vst [vmem:[%s301] sm:$0xff] %v1438
        %1447 = vst [vmem:[%s301 + $0x8] sm:$0xff] %v1439
        %1448 = vst [vmem:[%s301 + $0x10] sm:$0xff] %v1440
        %1449 = vst [vmem:[%s301 + $0x18] sm:$0xff] %v1441
        %1450 = vst [vmem:[%s301 + $0x20] sm:$0xff] %v1442
        %1451 = vst [vmem:[%s301 + $0x28] sm:$0xff] %v1443
        %1452 = vst [vmem:[%s301 + $0x30] sm:$0xff] %v1444
        %1453 = vst [vmem:[%s301 + $0x38] sm:$0xff] %v1445
        %s1454 = sand.u32 %s142, 1
        %s1455 = scalar_lea.sflag [#allocation4], %s1454
        %s1456 = sand.u32 %s142, 1
        %s1457 = smul.addr %s1456, 64
        %s1458 = scalar_lea.vmem [#allocation10], %s1457
        // Predicated region
        $region57: #{tpu_custom_call.1} parent=39 // pred_check
          %p1459 = pneg %p152
        $region58: #{tpu_custom_call.1} parent=39 // pred_check_branch
          %1461 = sbr.rel (%p1459) target = $region60
        $region59: #{tpu_custom_call.1} parent=39 // pred_region
          %s1462 = smul.u32 4, %s24
          %s1463 = ssub.s32 7, %s1462
          %p1464 = scmp.lt.s32.totalorder %s1463, 4
          %s1465 = scalar_select %p1464, %s1463, 4
          %s1466 = smul.u32 8, %s1465
          %s1467 = smul.u32 %s1466, 2
          %s1468 = ssub.s32 64, %s1467
          %s1469 = sshll.u32 %s1468, 4
          %1470 = vsyncadd %s1455, %s1469
          %p1471 = scmp.ne.s32.totalorder 0, %s1467
          %s1472 = smul.addr %s1462, 2
          %s1473 = smul.addr %s1472, 8
          %s1474 = scalar_lea.hbm %s5, %s1473
          %s1475 = smul.u32 16, %s1465
          %s1476 = sshll.u32 %s1458, 4
          %s1477 = int_to_ptr.vmem [resolvable:$true] %s1476
          %s1478 = sshll.u32 %s1474, 4
          %s1479 = int_to_ptr.hbm [resolvable:$true] %s1478
          %s1480 = sshll.u32 %s1475, 4
          %1484 = dma.vmem_to_hbm [thread:$0]  (%p1471), %s1477, %s1480, %s1479, %s1455, 256, 256, 16
        $region60: #{tpu_custom_call.1} parent=39 // pred_fallthru
          _
      $region40: #{tpu_custom_call.1} parent=5 // pred_fallthru
        _
      %p1485 = scmp.le.s32.totalorder 2, %s19
      // Predicated region
      $region61: #{tpu_custom_call.1} parent=5 // pred_check
        %p1486 = pneg %p1485
      $region62: #{tpu_custom_call.1} parent=5 // pred_check_branch
        %1488 = sbr.rel (%p1486) target = $region64
      $region63: #{tpu_custom_call.1} parent=5 // pred_region
        %s1489 = ssub.s32 %s19, 2
        // Predicated region
        $region65: #{tpu_custom_call.1} parent=63 // pred_check
          %p1490 = pneg %p158
        $region66: #{tpu_custom_call.1} parent=63 // pred_check_branch
          %1492 = sbr.rel (%p1490) target = $region68
        $region67: #{tpu_custom_call.1} parent=63 // pred_region
          %s1493 = sand.u32 %s143, 1
          %s1494 = scalar_lea.sflag [#allocation4], %s1493
          %s1495 = sand.u32 %s143, 1
          %s1496 = smul.addr %s1495, 64
          %s1497 = scalar_lea.vmem [#allocation10], %s1496
          %1499 = dma.done %s1494, 1024
        $region68: #{tpu_custom_call.1} parent=63 // pred_fallthru
          _
      $region64: #{tpu_custom_call.1} parent=5 // pred_fallthru
        _
    $region6: #{tpu_custom_call.1} parent=1 // loop_footer
      %s23 = sadd.s32 1, %s19
    $region7: #{tpu_custom_call.1} parent=1 // loop_footer_branch
      %18 = sbr.rel target = $region3
    $region8: #{tpu_custom_call.1} parent=1 // loop_exit
      _
    %1500 = vsyncpa [#allocation3], 1
    %s1501 = scalar_lea.sflag [#allocation3], 1
    %1502 = vsyncpa %s1501, 1
    %1503 = vsyncpa [#allocation6], 1
    %1504 = vsyncpa [#allocation9], 1
    %1505 = vsyncpa [#allocation4], 1
    %s1506 = scalar_lea.sflag [#allocation4], 1
    %1507 = vsyncpa %s1506, 1

</llo_original>
